<compile_context>
chip_gen: v7x
topology: tpu7x:2x2x1
jax: 0.10.0
libtpu: 0.0.40
codegen_flags: <defaults>
</compile_context>

<pallas_src>
import jax
import jax.numpy as jnp
from jax.experimental import pallas as pl
from jax.experimental.pallas import tpu as pltpu


def _round_up(n: int, m: int) -> int:
    return ((n + m - 1) // m) * m


def qnet_kernel(x_ref, w1_ref, b1_ref, w2_ref, b2_ref, out_ref):
    # fc1: matmul with f32 accumulation, bias + ReLU in f32.
    h = jnp.dot(x_ref[...], w1_ref[...], preferred_element_type=jnp.float32)
    h = jnp.maximum(h + b1_ref[...], 0.0)
    # fc2: the hidden activation stays in VMEM/vregs (f32), narrow output.
    y = jnp.dot(h, w2_ref[...], preferred_element_type=jnp.float32)
    out_ref[...] = (y + b2_ref[...]).astype(out_ref.dtype)


def prepare_qnet_params(w1, b1, w2, b2):
    """One-time parameter prep (call once, reuse every forward).

    w1: [S, H], b1: [H], w2: [H, A], b2: [A]  (weights stored as [in, out]).
    Pads the hidden dim up to a multiple of 128 (zero pad => same math) and
    reshapes biases to [1, dim] rows. Doing this once keeps the per-call
    wrapper free of pad/cast HBM round-trips.
    """
    S, H = w1.shape
    A = w2.shape[1]
    Hp = _round_up(H, 128)
    w1p = jnp.pad(w1.astype(jnp.float32), ((0, 0), (0, Hp - H)))
    b1p = jnp.pad(b1.reshape(1, H).astype(jnp.float32), ((0, 0), (0, Hp - H)))
    w2p = jnp.pad(w2.astype(jnp.float32), ((0, Hp - H), (0, 0)))
    b2p = b2.reshape(1, A).astype(jnp.float32)
    return w1p, b1p, w2p, b2p


def _choose_batch_tile(B: int, batch_tile_cap: int) -> int:
    # Aim for >= 2 tiles when B is large (so v7x can use both TensorCores),
    # keep the tile sublane-aligned, and cap it so VMEM stays small.
    tm = _round_up(pl.cdiv(B, 2), 16)
    return max(16, min(tm, batch_tile_cap))


def qnet_forward(x, params, *, batch_tile=2048):
    """x: [B, S] float32; params from prepare_qnet_params. Returns [B, A] f32."""
    w1p, b1p, w2p, b2p = params
    B, S = x.shape
    Hp = w1p.shape[1]
    A = w2p.shape[1]

    TM = _choose_batch_tile(B, batch_tile)
    n_tiles = pl.cdiv(B, TM)

    cost = pl.CostEstimate(
        flops=2 * B * (S * Hp + Hp * A),
        transcendentals=0,
        bytes_accessed=(x.size * x.dtype.itemsize
                        + w1p.size * 4 + b1p.size * 4
                        + w2p.size * 4 + b2p.size * 4
                        + B * A * 4),
    )

    out = pl.pallas_call(
        qnet_kernel,
        out_shape=jax.ShapeDtypeStruct((B, A), jnp.float32),
        grid=(n_tiles,),
        in_specs=[
            pl.BlockSpec((TM, S), lambda i: (i, 0)),    # x: streamed per tile
            pl.BlockSpec((S, Hp), lambda i: (0, 0)),    # w1: resident
            pl.BlockSpec((1, Hp), lambda i: (0, 0)),    # b1: resident
            pl.BlockSpec((Hp, A), lambda i: (0, 0)),    # w2: resident
            pl.BlockSpec((1, A), lambda i: (0, 0)),     # b2: resident
        ],
        out_specs=pl.BlockSpec((TM, A), lambda i: (i, 0)),
        compiler_params=pltpu.CompilerParams(
            dimension_semantics=("parallel",)),
        cost_estimate=cost,
    )(x, w1p, b1p, w2p, b2p)

    return out


def init_qnet_params(key, state_dim, hidden_dim, action_dim):
    """Deterministic init mimicking torch.nn.Linear (uniform +/- 1/sqrt(fan_in))."""
    k1, k2, k3, k4 = jax.random.split(key, 4)
    bound1 = 1.0 / (state_dim ** 0.5)
    bound2 = 1.0 / (hidden_dim ** 0.5)
    # Stored already transposed to [in, out] for the kernel.
    w1 = jax.random.uniform(k1, (state_dim, hidden_dim), jnp.float32,
                            -bound1, bound1)
    b1 = jax.random.uniform(k2, (hidden_dim,), jnp.float32, -bound1, bound1)
    w2 = jax.random.uniform(k3, (hidden_dim, action_dim), jnp.float32,
                            -bound2, bound2)
    b2 = jax.random.uniform(k4, (action_dim,), jnp.float32, -bound2, bound2)
    return w1, b1, w2, b2


def _reference(x, w1, b1, w2, b2):
    return jnp.maximum(x @ w1 + b1, 0.0) @ w2 + b2


if __name__ == "__main__":
    # Small shapes consistent with a Q-network: state_dim=16, hidden_dim=32,
    # action_dim=8.
    S, H, A = 16, 32, 8
    key = jax.random.PRNGKey(0)
    kx1, kx2, kp = jax.random.split(key, 3)
    w1, b1, w2, b2 = init_qnet_params(kp, S, H, A)
    params = prepare_qnet_params(w1, b1, w2, b2)   # one-time prep, reused below

    # Case 1: tiny batch (single partial tile).
    B1 = 2
    x1 = jax.random.normal(kx1, (B1, S), dtype=jnp.float32)
    out1 = jax.block_until_ready(qnet_forward(x1, params))
    assert out1.shape == (B1, A)
    ref1 = _reference(x1, w1, b1, w2, b2)
    assert jnp.allclose(out1, ref1, atol=2e-2, rtol=2e-2), "case 1 mismatch"

    # Case 2: batch not a multiple of the tile -> two tiles, masked last tile.
    B2 = 300
    x2 = jax.random.normal(kx2, (B2, S), dtype=jnp.float32)
    out2 = jax.block_until_ready(qnet_forward(x2, params))
    assert out2.shape == (B2, A)
    ref2 = _reference(x2, w1, b1, w2, b2)
    assert jnp.allclose(out2, ref2, atol=2e-2, rtol=2e-2), "case 2 mismatch"

    print("KERNEL_OK")
</pallas_src>

<mosaic_0001>
module attributes {stable_mosaic.version = 11 : i64} {
  func.func @qnet_kernel(%arg0: i32, %arg1: memref<16x16xf32, #tpu.memory_space<vmem>>, %arg2: memref<16x128xf32, #tpu.memory_space<vmem>>, %arg3: memref<1x128xf32, #tpu.memory_space<vmem>>, %arg4: memref<128x8xf32, #tpu.memory_space<vmem>>, %arg5: memref<1x8xf32, #tpu.memory_space<vmem>>, %arg6: memref<16x8xf32, #tpu.memory_space<vmem>>) attributes {dimension_semantics = [#tpu.dimension_semantics<parallel>], iteration_bounds = array<i64: 1>, scalar_prefetch = 0 : i64, scratch_operands = 0 : i64, tpu.core_type = #tpu.core_type<tc>, window_params = [{transform_indices = @transform_0, window_bounds = array<i64: 16, 16>}, {pipeline_mode = #tpu.pipeline_mode<synchronous>, transform_indices = @transform_1, window_bounds = array<i64: 16, 128>}, {pipeline_mode = #tpu.pipeline_mode<synchronous>, transform_indices = @transform_2, window_bounds = array<i64: 1, 128>}, {pipeline_mode = #tpu.pipeline_mode<synchronous>, transform_indices = @transform_3, window_bounds = array<i64: 128, 8>}, {pipeline_mode = #tpu.pipeline_mode<synchronous>, transform_indices = @transform_4, window_bounds = array<i64: 1, 8>}, {transform_indices = @transform_5, window_bounds = array<i64: 16, 8>}]} {
    %c0 = arith.constant 0 : index
    %c0_0 = arith.constant 0 : index
    %0 = vector.load %arg1[%c0, %c0_0] : memref<16x16xf32, #tpu.memory_space<vmem>>, vector<16x16xf32>
    %c0_1 = arith.constant 0 : index
    %c0_2 = arith.constant 0 : index
    %1 = vector.load %arg2[%c0_1, %c0_2] : memref<16x128xf32, #tpu.memory_space<vmem>>, vector<16x128xf32>
    %cst = arith.constant dense<0.000000e+00> : vector<16x128xf32>
    %2 = tpu.matmul %0, %1, %cst {dimension_numbers = #tpu.dot_dimension_numbers<[1], [0], [0], [1], [0, 0, 1, 1], [], []>} : vector<16x16xf32>, vector<16x128xf32>, vector<16x128xf32> -> vector<16x128xf32>
    %c0_3 = arith.constant 0 : index
    %c0_4 = arith.constant 0 : index
    %3 = vector.load %arg3[%c0_3, %c0_4] : memref<1x128xf32, #tpu.memory_space<vmem>>, vector<1x128xf32>
    %4 = vector.broadcast %3 : vector<1x128xf32> to vector<16x128xf32>
    %5 = arith.addf %2, %4 : vector<16x128xf32>
    %cst_5 = arith.constant 0.000000e+00 : f32
    %6 = vector.broadcast %cst_5 : f32 to vector<16x128xf32>
    %7 = arith.maximumf %5, %6 : vector<16x128xf32>
    %c0_6 = arith.constant 0 : index
    %c0_7 = arith.constant 0 : index
    %8 = vector.load %arg4[%c0_6, %c0_7] : memref<128x8xf32, #tpu.memory_space<vmem>>, vector<128x8xf32>
    %cst_8 = arith.constant dense<0.000000e+00> : vector<16x8xf32>
    %9 = tpu.matmul %7, %8, %cst_8 {dimension_numbers = #tpu.dot_dimension_numbers<[1], [0], [0], [1], [0, 0, 1, 1], [], []>} : vector<16x128xf32>, vector<128x8xf32>, vector<16x8xf32> -> vector<16x8xf32>
    %c0_9 = arith.constant 0 : index
    %c0_10 = arith.constant 0 : index
    %10 = vector.load %arg5[%c0_9, %c0_10] : memref<1x8xf32, #tpu.memory_space<vmem>>, vector<1x8xf32>
    %11 = vector.broadcast %10 : vector<1x8xf32> to vector<16x8xf32>
    %12 = arith.addf %9, %11 : vector<16x8xf32>
    %c0_11 = arith.constant 0 : index
    %c0_12 = arith.constant 0 : index
    %13 = vector.load %arg6[%c0_11, %c0_12] : memref<16x8xf32, #tpu.memory_space<vmem>>, vector<16x8xf32>
    tpu.vector_store %arg6[%c0_11, %c0_12], %12 {strides = array<i32>} : memref<16x8xf32, #tpu.memory_space<vmem>>, vector<16x8xf32>,
    return
  }
  func.func @transform_0(%arg0: i32) -> (i32, i32) {
    %c0_i32 = arith.constant 0 : i32
    %c0_i32_0 = arith.constant 0 : i32
    return %arg0, %c0_i32 : i32, i32
  }
  func.func @transform_1(%arg0: i32) -> (i32, i32) {
    %c0_i32 = arith.constant 0 : i32
    %c0_i32_0 = arith.constant 0 : i32
    %c0_i32_1 = arith.constant 0 : i32
    return %c0_i32, %c0_i32_0 : i32, i32
  }
  func.func @transform_2(%arg0: i32) -> (i32, i32) {
    %c0_i32 = arith.constant 0 : i32
    %c0_i32_0 = arith.constant 0 : i32
    %c0_i32_1 = arith.constant 0 : i32
    return %c0_i32, %c0_i32_0 : i32, i32
  }
  func.func @transform_3(%arg0: i32) -> (i32, i32) {
    %c0_i32 = arith.constant 0 : i32
    %c0_i32_0 = arith.constant 0 : i32
    %c0_i32_1 = arith.constant 0 : i32
    return %c0_i32, %c0_i32_0 : i32, i32
  }
  func.func @transform_4(%arg0: i32) -> (i32, i32) {
    %c0_i32 = arith.constant 0 : i32
    %c0_i32_0 = arith.constant 0 : i32
    %c0_i32_1 = arith.constant 0 : i32
    return %c0_i32, %c0_i32_0 : i32, i32
  }
  func.func @transform_5(%arg0: i32) -> (i32, i32) {
    %c0_i32 = arith.constant 0 : i32
    %c0_i32_0 = arith.constant 0 : i32
    return %arg0, %c0_i32 : i32, i32
  }
}

</mosaic_0001>

<llo_original>
// kernel: tpu_custom_call.1
$region0: #{tpu_custom_call.1}
  #allocation0 [shape = 'u32[]', space=smem, size = 0x4, offset = 0x4, fixed_abs, tag = 'smem constant byte address 0x4 - core index']
  #allocation1 [shape = 'u32[144,128]{1,0:T(1,128)}', space=vmem, size = 0x12000, scoped, tag = 'internal scratch']
  %s0 = inlined_call_operand.vmem [shape: f32[2,16], index: 0, kind: input, shape index: {}]
  %s1 = inlined_call_operand.vmem [shape: f32[16,128], index: 1, kind: input, shape index: {}]
  %s2 = inlined_call_operand.vmem [shape: f32[1,128], index: 2, kind: input, shape index: {}]
  %s3 = inlined_call_operand.vmem [shape: f32[128,8], index: 3, kind: input, shape index: {}]
  %s4 = inlined_call_operand.vmem [shape: f32[1,8], index: 4, kind: input, shape index: {}]
  %s5 = inlined_call_operand.hbm [shape: f32[2,8], index: 5, kind: output, shape index: {}]
  %s6 = sld [smem:[#allocation0]]
  $region30: #{tpu_custom_call.1} parent=0
    _
  %s8 = ssub.s32 1, %s6
  %s9 = scalar_select 0, %s8, %s6
  $region1: #{tpu_custom_call.1} parent=0
    #allocation2 [shape = 'u8[8192]{0}', space=vmem, size = 0x2000, scoped, tag = 'output window, operand 0, single buffered']
    #allocation3 [shape = 's32[1]{0}', space=sflag, size = 0x4, scoped, tag = 'scoped memory for tpu_custom_call.1']
    %10 = vsyncpa [#allocation3], 0
    // Predicated region
    $region2: #{tpu_custom_call.1} parent=1 // pred_check
      _
    $region3: #{tpu_custom_call.1} parent=1 // pred_check_branch
      %12 = sbr.rel (0) target = $region5
    $region4: #{tpu_custom_call.1} parent=1 // pred_region
      _
    $region5: #{tpu_custom_call.1} parent=1 // pred_fallthru
      _
    // Predicated region
    $region6: #{tpu_custom_call.1} parent=1 // pred_check
      _
    $region7: #{tpu_custom_call.1} parent=1 // pred_check_branch
      %14 = sbr.rel (0) target = $region9
    $region8: #{tpu_custom_call.1} parent=1 // pred_region
      _
    $region9: #{tpu_custom_call.1} parent=1 // pred_fallthru
      _
    // Predicated region
    $region10: #{tpu_custom_call.1} parent=1 // pred_check
      _
    $region11: #{tpu_custom_call.1} parent=1 // pred_check_branch
      %16 = sbr.rel (0) target = $region13
    $region12: #{tpu_custom_call.1} parent=1 // pred_region
      _
    $region13: #{tpu_custom_call.1} parent=1 // pred_fallthru
      _
    // Predicated region
    $region14: #{tpu_custom_call.1} parent=1 // pred_check
      _
    $region15: #{tpu_custom_call.1} parent=1 // pred_check_branch
      %18 = sbr.rel (0) target = $region17
    $region16: #{tpu_custom_call.1} parent=1 // pred_region
      _
    $region17: #{tpu_custom_call.1} parent=1 // pred_fallthru
      _
    // Predicated region
    $region18: #{tpu_custom_call.1} parent=1 // pred_check
      _
    $region19: #{tpu_custom_call.1} parent=1 // pred_check_branch
      %20 = sbr.rel (0) target = $region21
    $region20: #{tpu_custom_call.1} parent=1 // pred_region
      _
    $region21: #{tpu_custom_call.1} parent=1 // pred_fallthru
      _
    %v21 = vld [vmem:[%s0] sm:$0xff]
    %v22 = vld [vmem:[%s0 + $0x8] sm:$0xff]
    %v23 = vld [vmem:[%s1] sm:$0xff]
    %v24 = vld [vmem:[%s1 + $0x8] sm:$0xff]
    %v25 = vld [vmem:[%s2] sm:$0x1]
    %v27 = vlaneseq
    %v28 = vshrl.u32 %v27, 7
    %v29 = vsub.s32 0, %v28
    %v30 = vrot.slane %v25, %v29
    %vm32 = vcmask 130048
    %v34 = vsel %vm32, %v21, 0
    %v37 = vsel %vm32, %v22, 0
    %39 = vmatprep.subr.mxu0 0.0
    %40 = vmatpush1.msra.mxu0 %v23
    %41 = vmatprep.subr.mxu0 0.0
    %42 = vmatpush1.msra.mxu0 %v24
    %43 = vmatprep.subr.mxu0 0.0
    %44 = vmatpush1.msra.mxu0 0.0
    %45 = vmatprep.subr.mxu0 0.0
    %46 = vmatpush1.msra.mxu0 0.0
    %47 = vmatprep.subr.mxu0 0.0
    %48 = vmatpush1.msra.mxu0 0.0
    %49 = vmatprep.subr.mxu0 0.0
    %50 = vmatpush1.msra.mxu0 0.0
    %51 = vmatprep.subr.mxu0 0.0
    %52 = vmatpush1.msra.mxu0 0.0
    %53 = vmatprep.subr.mxu0 0.0
    %54 = vmatpush1.msra.mxu0 0.0
    %55 = vmatprep.subr.mxu0 0.0
    %56 = vmatpush1.msra.mxu0 0.0
    %57 = vmatprep.subr.mxu0 0.0
    %58 = vmatpush1.msra.mxu0 0.0
    %59 = vmatprep.subr.mxu0 0.0
    %60 = vmatpush1.msra.mxu0 0.0
    %61 = vmatprep.subr.mxu0 0.0
    %62 = vmatpush1.msra.mxu0 0.0
    %63 = vmatprep.subr.mxu0 0.0
    %64 = vmatpush1.msra.mxu0 0.0
    %65 = vmatprep.subr.mxu0 0.0
    %66 = vmatpush1.msra.mxu0 0.0
    %67 = vmatprep.subr.mxu0 0.0
    %68 = vmatpush1.msra.mxu0 0.0
    %69 = vmatprep.subr.mxu0 0.0
    %70 = vmatpush1.msra.mxu0 0.0
    %71 = vmatprep.subr.mxu0 0.0
    %72 = vmatpush1.msra.mxu0 0.0
    %73 = vmatprep.subr.mxu0 0.0
    %74 = vmatpush1.msra.mxu0 0.0
    %75 = vmatprep.subr.mxu0 0.0
    %76 = vmatpush1.msra.mxu0 0.0
    %77 = vmatprep.subr.mxu0 0.0
    %78 = vmatpush1.msra.mxu0 0.0
    %79 = vmatprep.subr.mxu0 0.0
    %80 = vmatpush1.msra.mxu0 0.0
    %81 = vmatprep.subr.mxu0 0.0
    %82 = vmatpush1.msra.mxu0 0.0
    %83 = vmatprep.subr.mxu0 0.0
    %84 = vmatpush1.msra.mxu0 0.0
    %85 = vmatprep.subr.mxu0 0.0
    %86 = vmatpush1.msra.mxu0 0.0
    %87 = vmatprep.subr.mxu0 0.0
    %88 = vmatpush1.msra.mxu0 0.0
    %89 = vmatprep.subr.mxu0 0.0
    %90 = vmatpush1.msra.mxu0 0.0
    %91 = vmatprep.subr.mxu0 0.0
    %92 = vmatpush1.msra.mxu0 0.0
    %93 = vmatprep.subr.mxu0 0.0
    %94 = vmatpush1.msra.mxu0 0.0
    %95 = vmatprep.subr.mxu0 0.0
    %96 = vmatpush1.msra.mxu0 0.0
    %97 = vmatprep.subr.mxu0 0.0
    %98 = vmatpush1.msra.mxu0 0.0
    %99 = vmatprep.subr.mxu0 0.0
    %100 = vmatpush1.msra.mxu0 0.0
    %101 = vmatprep.subr.mxu0 0.0
    %102 = vmatpush1.msra.mxu0 0.0
    %103 = vmatprep.mubr.f32.mxu0 0.0
    %104 = vmatmul.mubr.f32.gmra.mrb[0].mxu0 %v34
    %v105 = vpop.f32.mrb[0].mxu0
    %v106 = vadd.f32 %v30, %v105
    %v107 = vpop.f32.mrb[0].mxu0
    %108 = vmatprep.mubr.f32.mxu0 0.0
    %109 = vmatmul.mubr.f32.gmra.mrb[0].mxu0 %v37
    %v110 = vpop.f32.mrb[0].mxu0
    %v111 = vadd.f32 %v30, %v110
    %v112 = vpop.f32.mrb[0].mxu0
    %113 = vdwg.mxu0
    %v114 = vmax.f32 %v106, 0.0
    %v115 = vmax.f32 %v111, 0.0
    %v116 = vld [vmem:[%s3] sm:$0xff]
    %v117 = vld [vmem:[%s3 + $0x8] sm:$0xff]
    %v118 = vld [vmem:[%s3 + $0x10] sm:$0xff]
    %v119 = vld [vmem:[%s3 + $0x18] sm:$0xff]
    %v120 = vld [vmem:[%s3 + $0x20] sm:$0xff]
    %v121 = vld [vmem:[%s3 + $0x28] sm:$0xff]
    %v122 = vld [vmem:[%s3 + $0x30] sm:$0xff]
    %v123 = vld [vmem:[%s3 + $0x38] sm:$0xff]
    %v124 = vld [vmem:[%s3 + $0x40] sm:$0xff]
    %v125 = vld [vmem:[%s3 + $0x48] sm:$0xff]
    %v126 = vld [vmem:[%s3 + $0x50] sm:$0xff]
    %v127 = vld [vmem:[%s3 + $0x58] sm:$0xff]
    %v128 = vld [vmem:[%s3 + $0x60] sm:$0xff]
    %v129 = vld [vmem:[%s3 + $0x68] sm:$0xff]
    %v130 = vld [vmem:[%s3 + $0x70] sm:$0xff]
    %v131 = vld [vmem:[%s3 + $0x78] sm:$0xff]
    %v132 = vld [vmem:[%s4] sm:$0x1]
    %v134 = vlaneseq
    %v135 = vshrl.u32 %v134, 7
    %v136 = vsub.s32 0, %v135
    %v137 = vrot.slane %v132, %v136
    %139 = vmatprep.subr.mxu0 0.0
    %140 = vmatpush1.msra.mxu0 %v116
    %141 = vmatprep.subr.mxu0 0.0
    %142 = vmatpush1.msra.mxu0 %v117
    %143 = vmatprep.subr.mxu0 0.0
    %144 = vmatpush1.msra.mxu0 %v118
    %145 = vmatprep.subr.mxu0 0.0
    %146 = vmatpush1.msra.mxu0 %v119
    %147 = vmatprep.subr.mxu0 0.0
    %148 = vmatpush1.msra.mxu0 %v120
    %149 = vmatprep.subr.mxu0 0.0
    %150 = vmatpush1.msra.mxu0 %v121
    %151 = vmatprep.subr.mxu0 0.0
    %152 = vmatpush1.msra.mxu0 %v122
    %153 = vmatprep.subr.mxu0 0.0
    %154 = vmatpush1.msra.mxu0 %v123
    %155 = vmatprep.subr.mxu0 0.0
    %156 = vmatpush1.msra.mxu0 %v124
    %157 = vmatprep.subr.mxu0 0.0
    %158 = vmatpush1.msra.mxu0 %v125
    %159 = vmatprep.subr.mxu0 0.0
    %160 = vmatpush1.msra.mxu0 %v126
    %161 = vmatprep.subr.mxu0 0.0
    %162 = vmatpush1.msra.mxu0 %v127
    %163 = vmatprep.subr.mxu0 0.0
    %164 = vmatpush1.msra.mxu0 %v128
    %165 = vmatprep.subr.mxu0 0.0
    %166 = vmatpush1.msra.mxu0 %v129
    %167 = vmatprep.subr.mxu0 0.0
    %168 = vmatpush1.msra.mxu0 %v130
    %169 = vmatprep.subr.mxu0 0.0
    %170 = vmatpush1.msra.mxu0 %v131
    %171 = vmatprep.subr.mxu0 0.0
    %172 = vmatpush1.msra.mxu0 0.0
    %173 = vmatprep.subr.mxu0 0.0
    %174 = vmatpush1.msra.mxu0 0.0
    %175 = vmatprep.subr.mxu0 0.0
    %176 = vmatpush1.msra.mxu0 0.0
    %177 = vmatprep.subr.mxu0 0.0
    %178 = vmatpush1.msra.mxu0 0.0
    %179 = vmatprep.subr.mxu0 0.0
    %180 = vmatpush1.msra.mxu0 0.0
    %181 = vmatprep.subr.mxu0 0.0
    %182 = vmatpush1.msra.mxu0 0.0
    %183 = vmatprep.subr.mxu0 0.0
    %184 = vmatpush1.msra.mxu0 0.0
    %185 = vmatprep.subr.mxu0 0.0
    %186 = vmatpush1.msra.mxu0 0.0
    %187 = vmatprep.subr.mxu0 0.0
    %188 = vmatpush1.msra.mxu0 0.0
    %189 = vmatprep.subr.mxu0 0.0
    %190 = vmatpush1.msra.mxu0 0.0
    %191 = vmatprep.subr.mxu0 0.0
    %192 = vmatpush1.msra.mxu0 0.0
    %193 = vmatprep.subr.mxu0 0.0
    %194 = vmatpush1.msra.mxu0 0.0
    %195 = vmatprep.subr.mxu0 0.0
    %196 = vmatpush1.msra.mxu0 0.0
    %197 = vmatprep.subr.mxu0 0.0
    %198 = vmatpush1.msra.mxu0 0.0
    %199 = vmatprep.subr.mxu0 0.0
    %200 = vmatpush1.msra.mxu0 0.0
    %201 = vmatprep.subr.mxu0 0.0
    %202 = vmatpush1.msra.mxu0 0.0
    %203 = vmatprep.mubr.f32.mxu0 0.0
    %204 = vmatmul.mubr.f32.gmra.mrb[0].mxu0 %v114
    %v205 = vpop.f32.mrb[0].mxu0
    %v206 = vadd.f32 %v137, %v205
    %v207 = vpop.f32.mrb[0].mxu0
    %208 = vmatprep.mubr.f32.mxu0 0.0
    %209 = vmatmul.mubr.f32.gmra.mrb[0].mxu0 %v115
    %v210 = vpop.f32.mrb[0].mxu0
    %v211 = vadd.f32 %v137, %v210
    %v212 = vpop.f32.mrb[0].mxu0
    %213 = vdwg.mxu0
    %vm214 = vcmask 64512
    %215 = vst.msk [vmem:[#allocation2] sm:$0xff] %vm214, %v206
    %216 = vst.msk [vmem:[#allocation2 + $0x8] sm:$0xff] %vm214, %v211
    // Predicated region
    $region22: #{tpu_custom_call.1} parent=1 // pred_check
      _
    $region23: #{tpu_custom_call.1} parent=1 // pred_check_branch
      %218 = sbr.rel (0) target = $region25
    $region24: #{tpu_custom_call.1} parent=1 // pred_region
      %s220 = ssub.s32 256, 32
      %221 = vsyncadd [#allocation3], %s220
      %s222 = sshll.u32 [#allocation2], 4
      %s223 = int_to_ptr.vmem [resolvable:$true] %s222
      %228 = dma.vmem_to_hbm [thread:$0]  %s223, 32, %s5, [#allocation3], 32, 32, 2
    $region25: #{tpu_custom_call.1} parent=1 // pred_fallthru
      _
    // Predicated region
    $region26: #{tpu_custom_call.1} parent=1 // pred_check
      _
    $region27: #{tpu_custom_call.1} parent=1 // pred_check_branch
      %230 = sbr.rel (0) target = $region29
    $region28: #{tpu_custom_call.1} parent=1 // pred_region
      %231 = dma.done [#allocation3], 256
    $region29: #{tpu_custom_call.1} parent=1 // pred_fallthru
      _
    %232 = vsyncpa [#allocation3], 1

</llo_original>
